<compile_context>
chip_gen: v6e
topology: v6e:2x2x1
jax: 0.10.0
libtpu: 0.0.40
codegen_flags: <defaults>
</compile_context>

<pallas_src>
import functools

import jax
import jax.numpy as jnp
import numpy as np
from jax import lax
from jax.experimental import pallas as pl
from jax.experimental.pallas import tpu as pltpu


# ---------------------------------------------------------------------------
# Pallas kernel: full MLP critic forward for one batch tile.
# x_ref is batch-major (tb, obs_dim); activations are feature-major (h, cols).
# ---------------------------------------------------------------------------
def _mlp_critic_kernel(x_ref, w1_ref, b1_ref, w2_ref, b2_ref, w3_ref, b3_ref,
                       out_ref, *, chunk):
    tb = x_ref.shape[0]

    # Tiny weights/biases are VMEM-resident for the whole grid; read once.
    w1 = w1_ref[...]
    b1 = b1_ref[...]
    w2 = w2_ref[...]
    b2 = b2_ref[...]
    w3 = w3_ref[...]
    b3 = b3_ref[...]

    def compute(start, size):
        # Batch-major chunk straight from the streamed block (contiguous HBM
        # reads -> no wrapper-side transpose); single upcast supports a bf16
        # obs stream on every generation.
        xc = x_ref[pl.ds(start, size), :].astype(jnp.float32)        # (size, obs)

        # Layer 1: contract the minor dims of both operands (flash-attention
        # "q @ k.T" dot_general pattern) so the result is feature-major with
        # the batch chunk on the lane axis.
        h1 = lax.dot_general(w1, xc, (((1,), (1,)), ((), ())),
                             preferred_element_type=jnp.float32)      # (h1, size)
        h1 = jnp.tanh(h1 + b1)                                        # lane-dense

        h2 = jnp.dot(w2, h1, preferred_element_type=jnp.float32)      # (h2, size)
        h2 = jnp.tanh(h2 + b2)

        v = jnp.dot(w3, h2, preferred_element_type=jnp.float32) + b3  # (1, size)
        out_ref[:, pl.ds(start, size)] = v.astype(out_ref.dtype)

    # Fully-unrolled chunk loop (static offsets): bounds the live vreg set per
    # chunk and lets the scheduler overlap chunk i's tanh with chunk i+1's
    # matmuls.  tb and chunk are both multiples of 128, so every slice and
    # store stays lane-aligned.
    n_full, rem = divmod(tb, chunk)
    for c in range(n_full):
        compute(c * chunk, chunk)
    if rem:
        compute(n_full * chunk, rem)


# ---------------------------------------------------------------------------
# Wrapper
# ---------------------------------------------------------------------------
def mlp_critic_forward(obs, params, *, block_batch=4096, chunk_cols=256,
                       input_dtype=None):
    """Runs the MLPCritic forward pass.  Returns values of shape (batch,)."""
    w1, b1, w2, b2, w3, b3 = params
    batch, obs_dim = obs.shape
    h1, h2 = w1.shape[0], w2.shape[0]

    # Optional narrow HBM storage for the obs stream.  Valid on v5e/v6e/v7x:
    # the kernel upcasts to f32 immediately after the block load, so only the
    # HBM bytes shrink; all matmul accumulation / tanh stays f32.
    if input_dtype is not None:
        obs = obs.astype(input_dtype)

    lanes = 128
    rounded = pl.cdiv(batch, lanes) * lanes            # lane-dense minimum
    tb = max(lanes, min(int(block_batch), rounded))
    # Keep >= 2 grid steps whenever the batch is big enough to split, so the
    # "parallel" batch axis spans both TensorCores on v7x (measured neutral on
    # single-TC v5e/v6e).
    if rounded > lanes and rounded <= tb:
        tb = pl.cdiv(pl.cdiv(rounded, 2), lanes) * lanes
    num_blocks = pl.cdiv(batch, tb)
    padded = num_blocks * tb

    # obs stays batch-major: no materialized HBM transpose.  Pad only when the
    # batch is ragged w.r.t. the tile (no-op for typical rollout sizes).
    if padded != batch:
        obs = jnp.pad(obs, ((0, padded - batch), (0, 0)))

    chunk = max(lanes, (min(int(chunk_cols), tb) // lanes) * lanes)

    cost = pl.CostEstimate(
        flops=2 * padded * (obs_dim * h1 + h1 * h2 + h2),
        transcendentals=padded * (h1 + h2),
        bytes_accessed=padded * (obs_dim * obs.dtype.itemsize + 4)
        + sum(int(np.prod(p.shape)) * 4 for p in params),
    )

    kernel = functools.partial(_mlp_critic_kernel, chunk=chunk)

    out = pl.pallas_call(
        kernel,
        out_shape=jax.ShapeDtypeStruct((1, padded), jnp.float32),
        grid=(num_blocks,),
        in_specs=[
            pl.BlockSpec((tb, obs_dim), lambda i: (i, 0)),   # streamed obs tile
            pl.BlockSpec(w1.shape, lambda i: (0, 0)),        # weights: DMA'd once,
            pl.BlockSpec(b1.shape, lambda i: (0, 0)),        # VMEM-resident
            pl.BlockSpec(w2.shape, lambda i: (0, 0)),
            pl.BlockSpec(b2.shape, lambda i: (0, 0)),
            pl.BlockSpec(w3.shape, lambda i: (0, 0)),
            pl.BlockSpec(b3.shape, lambda i: (0, 0)),
        ],
        out_specs=pl.BlockSpec((1, tb), lambda i: (0, i)),   # lane-dense value row
        compiler_params=pltpu.CompilerParams(
            dimension_semantics=("parallel",)),
        cost_estimate=cost,
    )(obs, w1, b1, w2, b2, w3, b3)

    # torch.squeeze on the (batch, 1) values -> (batch,).  Explicit slicing so
    # batch == 1 does not collapse to a 0-d scalar.
    return out[0, :batch]


# ---------------------------------------------------------------------------
# Deterministic parameter init (mirrors nn.init.orthogonal_ + zero bias).
# Weights are kept in torch layout (out, in); biases are (out, 1) columns for
# lane-broadcast against (out, cols) feature-major activations.
# ---------------------------------------------------------------------------
def orthogonal_init(key, out_dim, in_dim, gain):
    rows, cols = out_dim, in_dim
    flat = jax.random.normal(key, (rows, cols), dtype=jnp.float32)
    if rows < cols:
        flat = flat.T
    q, r = jnp.linalg.qr(flat)
    d = jnp.sign(jnp.diagonal(r))
    d = jnp.where(d == 0, 1.0, d)   # guard against a (measure-zero) zero diag
    q = q * d[None, :]
    if rows < cols:
        q = q.T
    return gain * q                 # (out, in) torch layout


def make_params(key, obs_dim, hidden_sizes):
    sizes = [obs_dim] + list(hidden_sizes) + [1]
    gains = [float(np.sqrt(2.0))] * len(hidden_sizes) + [1.0]
    params = []
    for i, gain in enumerate(gains):
        key, sub = jax.random.split(key)
        w = orthogonal_init(sub, sizes[i + 1], sizes[i], gain)   # (out, in)
        b = jnp.zeros((sizes[i + 1], 1), dtype=jnp.float32)      # (out, 1)
        params.extend([w, b])
    return tuple(params)


def _reference(obs, params):
    w1, b1, w2, b2, w3, b3 = params
    h = jnp.tanh(obs @ w1.T + b1.T)
    h = jnp.tanh(h @ w2.T + b2.T)
    return jnp.squeeze(h @ w3.T + b3.T, axis=-1)


# ---------------------------------------------------------------------------
if __name__ == "__main__":
    key = jax.random.PRNGKey(0)
    batch, obs_dim = 8, 16
    hidden_sizes = [32, 32]      # two tanh hidden layers (nn.Tanh)

    k_obs, k_par = jax.random.split(key)
    obs = jax.random.normal(k_obs, (batch, obs_dim), dtype=jnp.float32)
    params = make_params(k_par, obs_dim, hidden_sizes)

    # Small batch: single 128-wide tile (no over-padding to the block size).
    v = mlp_critic_forward(obs, params)
    jax.block_until_ready(v)
    np.testing.assert_allclose(np.asarray(v), np.asarray(_reference(obs, params)),
                               rtol=1e-5, atol=1e-5)
    assert v.shape == (batch,)

    # Larger batch: exercises the multi-step grid and the unrolled chunk loop.
    batch2 = 1024
    obs2 = jax.random.normal(jax.random.PRNGKey(1), (batch2, obs_dim),
                             dtype=jnp.float32)
    v2 = mlp_critic_forward(obs2, params)
    jax.block_until_ready(v2)
    np.testing.assert_allclose(np.asarray(v2),
                               np.asarray(_reference(obs2, params)),
                               rtol=1e-5, atol=1e-5)

    # bf16 obs-stream path (halves HBM traffic on the only large input; valid
    # on every TPU generation): loose check.
    v_bf16 = mlp_critic_forward(obs2, params, input_dtype=jnp.bfloat16)
    jax.block_until_ready(v_bf16)
    np.testing.assert_allclose(np.asarray(v_bf16),
                               np.asarray(_reference(obs2, params)),
                               rtol=5e-2, atol=1e-1)

    print("KERNEL_OK")
</pallas_src>

<mosaic_0001>
module attributes {stable_mosaic.version = 11 : i64} {
  func.func @_mlp_critic_kernel(%arg0: i32, %arg1: memref<128x16xf32, #tpu.memory_space<vmem>>, %arg2: memref<32x16xf32, #tpu.memory_space<vmem>>, %arg3: memref<32x1xf32, #tpu.memory_space<vmem>>, %arg4: memref<32x32xf32, #tpu.memory_space<vmem>>, %arg5: memref<32x1xf32, #tpu.memory_space<vmem>>, %arg6: memref<1x32xf32, #tpu.memory_space<vmem>>, %arg7: memref<1x1xf32, #tpu.memory_space<vmem>>, %arg8: memref<1x128xf32, #tpu.memory_space<vmem>>) attributes {dimension_semantics = [#tpu.dimension_semantics<parallel>], iteration_bounds = array<i64: 1>, scalar_prefetch = 0 : i64, scratch_operands = 0 : i64, tpu.core_type = #tpu.core_type<tc>, window_params = [{transform_indices = @transform_0, window_bounds = array<i64: 128, 16>}, {pipeline_mode = #tpu.pipeline_mode<synchronous>, transform_indices = @transform_1, window_bounds = array<i64: 32, 16>}, {pipeline_mode = #tpu.pipeline_mode<synchronous>, transform_indices = @transform_2, window_bounds = array<i64: 32, 1>}, {pipeline_mode = #tpu.pipeline_mode<synchronous>, transform_indices = @transform_3, window_bounds = array<i64: 32, 32>}, {pipeline_mode = #tpu.pipeline_mode<synchronous>, transform_indices = @transform_4, window_bounds = array<i64: 32, 1>}, {pipeline_mode = #tpu.pipeline_mode<synchronous>, transform_indices = @transform_5, window_bounds = array<i64: 1, 32>}, {pipeline_mode = #tpu.pipeline_mode<synchronous>, transform_indices = @transform_6, window_bounds = array<i64: 1, 1>}, {transform_indices = @transform_7, window_bounds = array<i64: 1, 128>}]} {
    %c0 = arith.constant 0 : index
    %c0_0 = arith.constant 0 : index
    %0 = vector.load %arg2[%c0, %c0_0] : memref<32x16xf32, #tpu.memory_space<vmem>>, vector<32x16xf32>
    %c0_1 = arith.constant 0 : index
    %c0_2 = arith.constant 0 : index
    %1 = vector.load %arg3[%c0_1, %c0_2] : memref<32x1xf32, #tpu.memory_space<vmem>>, vector<32x1xf32>
    %c0_3 = arith.constant 0 : index
    %c0_4 = arith.constant 0 : index
    %2 = vector.load %arg4[%c0_3, %c0_4] : memref<32x32xf32, #tpu.memory_space<vmem>>, vector<32x32xf32>
    %c0_5 = arith.constant 0 : index
    %c0_6 = arith.constant 0 : index
    %3 = vector.load %arg5[%c0_5, %c0_6] : memref<32x1xf32, #tpu.memory_space<vmem>>, vector<32x1xf32>
    %c0_7 = arith.constant 0 : index
    %c0_8 = arith.constant 0 : index
    %4 = vector.load %arg6[%c0_7, %c0_8] : memref<1x32xf32, #tpu.memory_space<vmem>>, vector<1x32xf32>
    %c0_9 = arith.constant 0 : index
    %c0_10 = arith.constant 0 : index
    %5 = vector.load %arg7[%c0_9, %c0_10] : memref<1x1xf32, #tpu.memory_space<vmem>>, vector<1x1xf32>
    %c0_11 = arith.constant 0 : index
    %c0_12 = arith.constant 0 : index
    %6 = vector.load %arg1[%c0_11, %c0_12] : memref<128x16xf32, #tpu.memory_space<vmem>>, vector<128x16xf32>
    %cst = arith.constant dense<0.000000e+00> : vector<32x128xf32>
    %7 = tpu.matmul %0, %6, %cst {dimension_numbers = #tpu.dot_dimension_numbers<[1], [1], [0], [0], [0, 0, 1, 0], [], []>} : vector<32x16xf32>, vector<128x16xf32>, vector<32x128xf32> -> vector<32x128xf32>
    %8 = vector.broadcast %1 : vector<32x1xf32> to vector<32x128xf32>
    %9 = arith.addf %7, %8 : vector<32x128xf32>
    %10 = math.tanh %9 : vector<32x128xf32>
    %cst_13 = arith.constant dense<0.000000e+00> : vector<32x128xf32>
    %11 = tpu.matmul %2, %10, %cst_13 {dimension_numbers = #tpu.dot_dimension_numbers<[1], [0], [0], [1], [0, 0, 1, 1], [], []>} : vector<32x32xf32>, vector<32x128xf32>, vector<32x128xf32> -> vector<32x128xf32>
    %12 = vector.broadcast %3 : vector<32x1xf32> to vector<32x128xf32>
    %13 = arith.addf %11, %12 : vector<32x128xf32>
    %14 = math.tanh %13 : vector<32x128xf32>
    %cst_14 = arith.constant dense<0.000000e+00> : vector<1x128xf32>
    %15 = tpu.matmul %4, %14, %cst_14 {dimension_numbers = #tpu.dot_dimension_numbers<[1], [0], [0], [1], [0, 0, 1, 1], [], []>} : vector<1x32xf32>, vector<32x128xf32>, vector<1x128xf32> -> vector<1x128xf32>
    %16 = vector.broadcast %5 : vector<1x1xf32> to vector<1x128xf32>
    %17 = arith.addf %15, %16 : vector<1x128xf32>
    %c0_15 = arith.constant 0 : index
    %c0_16 = arith.constant 0 : index
    %18 = vector.load %arg8[%c0_15, %c0_16] : memref<1x128xf32, #tpu.memory_space<vmem>>, vector<1x128xf32>
    tpu.vector_store %arg8[%c0_15, %c0_16], %17 {strides = array<i32>} : memref<1x128xf32, #tpu.memory_space<vmem>>, vector<1x128xf32>,
    return
  }
  func.func @transform_0(%arg0: i32) -> (i32, i32) {
    %c0_i32 = arith.constant 0 : i32
    %c0_i32_0 = arith.constant 0 : i32
    return %arg0, %c0_i32 : i32, i32
  }
  func.func @transform_1(%arg0: i32) -> (i32, i32) {
    %c0_i32 = arith.constant 0 : i32
    %c0_i32_0 = arith.constant 0 : i32
    %c0_i32_1 = arith.constant 0 : i32
    return %c0_i32, %c0_i32_0 : i32, i32
  }
  func.func @transform_2(%arg0: i32) -> (i32, i32) {
    %c0_i32 = arith.constant 0 : i32
    %c0_i32_0 = arith.constant 0 : i32
    %c0_i32_1 = arith.constant 0 : i32
    return %c0_i32, %c0_i32_0 : i32, i32
  }
  func.func @transform_3(%arg0: i32) -> (i32, i32) {
    %c0_i32 = arith.constant 0 : i32
    %c0_i32_0 = arith.constant 0 : i32
    %c0_i32_1 = arith.constant 0 : i32
    return %c0_i32, %c0_i32_0 : i32, i32
  }
  func.func @transform_4(%arg0: i32) -> (i32, i32) {
    %c0_i32 = arith.constant 0 : i32
    %c0_i32_0 = arith.constant 0 : i32
    %c0_i32_1 = arith.constant 0 : i32
    return %c0_i32, %c0_i32_0 : i32, i32
  }
  func.func @transform_5(%arg0: i32) -> (i32, i32) {
    %c0_i32 = arith.constant 0 : i32
    %c0_i32_0 = arith.constant 0 : i32
    %c0_i32_1 = arith.constant 0 : i32
    return %c0_i32, %c0_i32_0 : i32, i32
  }
  func.func @transform_6(%arg0: i32) -> (i32, i32) {
    %c0_i32 = arith.constant 0 : i32
    %c0_i32_0 = arith.constant 0 : i32
    %c0_i32_1 = arith.constant 0 : i32
    return %c0_i32, %c0_i32_0 : i32, i32
  }
  func.func @transform_7(%arg0: i32) -> (i32, i32) {
    %c0_i32 = arith.constant 0 : i32
    %c0_i32_0 = arith.constant 0 : i32
    return %c0_i32, %arg0 : i32, i32
  }
}

</mosaic_0001>

<llo_original>
// kernel: tpu_custom_call.1
$region0: #{tpu_custom_call.1}
  #allocation0 [shape = 'u32[]', space=smem, size = 0x4, offset = 0x4, fixed_abs, tag = 'smem constant byte address 0x4 - core index']
  #allocation1 [shape = 'u32[144,128]{1,0:T(1,128)}', space=vmem, size = 0x12000, scoped, tag = 'internal scratch']
  #allocation2 [shape = 'f32[1,1]{1,0:T(1,128)S(1)}', space=vmem, size = 0x200, scoped, tag = 'scoped memory for tpu_custom_call.1']
  %s0 = inlined_call_operand.vmem [shape: f32[128,16], index: 0, kind: input, shape index: {}]
  %s1 = inlined_call_operand.vmem [shape: f32[32,16], index: 1, kind: input, shape index: {}]
  %s2 = inlined_call_operand.vmem [shape: f32[32,1], index: 2, kind: input, shape index: {}]
  %s3 = inlined_call_operand.vmem [shape: f32[32,32], index: 3, kind: input, shape index: {}]
  %s4 = inlined_call_operand.vmem [shape: f32[32,1], index: 4, kind: input, shape index: {}]
  %s5 = inlined_call_operand.vmem [shape: f32[1,32], index: 5, kind: input, shape index: {}]
  %s6 = inlined_call_operand.<no memory space> [shape: f32[1,1], index: 6, kind: input, shape index: {}]
  %s7 = inlined_call_operand.hbm [shape: f32[1,128], index: 7, kind: output, shape index: {}]
  %s8 = sld [smem:[#allocation0]]
  $region38: #{tpu_custom_call.1} parent=0
    _
  %s10 = ssub.s32 1, %s8
  %s11 = scalar_select 0, %s10, %s8
  %v12 = vstv %s6
  %13 = vst [vmem:[#allocation2] sm:$0x1] %v12
  $region1: #{tpu_custom_call.1} parent=0
    #allocation3 [shape = 'u8[512]{0}', space=vmem, size = 0x400, scoped, tag = 'output window, operand 0, single buffered']
    #allocation4 [shape = 's32[1]{0}', space=sflag, size = 0x4, scoped, tag = 'scoped memory for tpu_custom_call.1']
    %14 = vsyncpa [#allocation4], 0
    // Predicated region
    $region2: #{tpu_custom_call.1} parent=1 // pred_check
      _
    $region3: #{tpu_custom_call.1} parent=1 // pred_check_branch
      %16 = sbr.rel (0) target = $region5
    $region4: #{tpu_custom_call.1} parent=1 // pred_region
      _
    $region5: #{tpu_custom_call.1} parent=1 // pred_fallthru
      _
    // Predicated region
    $region6: #{tpu_custom_call.1} parent=1 // pred_check
      _
    $region7: #{tpu_custom_call.1} parent=1 // pred_check_branch
      %18 = sbr.rel (0) target = $region9
    $region8: #{tpu_custom_call.1} parent=1 // pred_region
      _
    $region9: #{tpu_custom_call.1} parent=1 // pred_fallthru
      _
    // Predicated region
    $region10: #{tpu_custom_call.1} parent=1 // pred_check
      _
    $region11: #{tpu_custom_call.1} parent=1 // pred_check_branch
      %20 = sbr.rel (0) target = $region13
    $region12: #{tpu_custom_call.1} parent=1 // pred_region
      _
    $region13: #{tpu_custom_call.1} parent=1 // pred_fallthru
      _
    // Predicated region
    $region14: #{tpu_custom_call.1} parent=1 // pred_check
      _
    $region15: #{tpu_custom_call.1} parent=1 // pred_check_branch
      %22 = sbr.rel (0) target = $region17
    $region16: #{tpu_custom_call.1} parent=1 // pred_region
      _
    $region17: #{tpu_custom_call.1} parent=1 // pred_fallthru
      _
    // Predicated region
    $region18: #{tpu_custom_call.1} parent=1 // pred_check
      _
    $region19: #{tpu_custom_call.1} parent=1 // pred_check_branch
      %24 = sbr.rel (0) target = $region21
    $region20: #{tpu_custom_call.1} parent=1 // pred_region
      _
    $region21: #{tpu_custom_call.1} parent=1 // pred_fallthru
      _
    // Predicated region
    $region22: #{tpu_custom_call.1} parent=1 // pred_check
      _
    $region23: #{tpu_custom_call.1} parent=1 // pred_check_branch
      %26 = sbr.rel (0) target = $region25
    $region24: #{tpu_custom_call.1} parent=1 // pred_region
      _
    $region25: #{tpu_custom_call.1} parent=1 // pred_fallthru
      _
    // Predicated region
    $region26: #{tpu_custom_call.1} parent=1 // pred_check
      _
    $region27: #{tpu_custom_call.1} parent=1 // pred_check_branch
      %28 = sbr.rel (0) target = $region29
    $region28: #{tpu_custom_call.1} parent=1 // pred_region
      _
    $region29: #{tpu_custom_call.1} parent=1 // pred_fallthru
      _
    %v29 = vld [vmem:[%s1] sm:$0xff]
    %v30 = vld [vmem:[%s1 + $0x8] sm:$0xff]
    %v31 = vld [vmem:[%s1 + $0x10] sm:$0xff]
    %v32 = vld [vmem:[%s1 + $0x18] sm:$0xff]
    %v33 = vld [vmem:[%s2] sm:$0xff]
    %v34 = vld [vmem:[%s2 + $0x8] sm:$0xff]
    %v35 = vld [vmem:[%s2 + $0x10] sm:$0xff]
    %v36 = vld [vmem:[%s2 + $0x18] sm:$0xff]
    %v37 = vld [vmem:[%s3] sm:$0xff]
    %v38 = vld [vmem:[%s3 + $0x8] sm:$0xff]
    %v39 = vld [vmem:[%s3 + $0x10] sm:$0xff]
    %v40 = vld [vmem:[%s3 + $0x18] sm:$0xff]
    %v41 = vld [vmem:[%s4] sm:$0xff]
    %v42 = vld [vmem:[%s4 + $0x8] sm:$0xff]
    %v43 = vld [vmem:[%s4 + $0x10] sm:$0xff]
    %v44 = vld [vmem:[%s4 + $0x18] sm:$0xff]
    %v45 = vld [vmem:[%s5] sm:$0x1]
    %v46 = vld [vmem:[#allocation2] sm:$0x1]
    %v47 = vld [vmem:[%s0] sm:$0xff]
    %v48 = vld [vmem:[%s0 + $0x8] sm:$0xff]
    %v49 = vld [vmem:[%s0 + $0x10] sm:$0xff]
    %v50 = vld [vmem:[%s0 + $0x18] sm:$0xff]
    %v51 = vld [vmem:[%s0 + $0x20] sm:$0xff]
    %v52 = vld [vmem:[%s0 + $0x28] sm:$0xff]
    %v53 = vld [vmem:[%s0 + $0x30] sm:$0xff]
    %v54 = vld [vmem:[%s0 + $0x38] sm:$0xff]
    %v55 = vld [vmem:[%s0 + $0x40] sm:$0xff]
    %v56 = vld [vmem:[%s0 + $0x48] sm:$0xff]
    %v57 = vld [vmem:[%s0 + $0x50] sm:$0xff]
    %v58 = vld [vmem:[%s0 + $0x58] sm:$0xff]
    %v59 = vld [vmem:[%s0 + $0x60] sm:$0xff]
    %v60 = vld [vmem:[%s0 + $0x68] sm:$0xff]
    %v61 = vld [vmem:[%s0 + $0x70] sm:$0xff]
    %v62 = vld [vmem:[%s0 + $0x78] sm:$0xff]
    %64 = vset.pattern.permute.xlu0 0
    %65 = vperm.xlu0 %64, %v33
    %v66 = vpop.permute.xlu0 %65
    %69 = vset.pattern.permute.xlu0 0
    %70 = vperm.xlu0 %69, %v34
    %v71 = vpop.permute.xlu0 %70
    %74 = vset.pattern.permute.xlu0 0
    %75 = vperm.xlu0 %74, %v35
    %v76 = vpop.permute.xlu0 %75
    %79 = vset.pattern.permute.xlu0 0
    %80 = vperm.xlu0 %79, %v36
    %v81 = vpop.permute.xlu0 %80
    %vm83 = vcmask 130048
    %v85 = vsel %vm83, %v29, 0
    %v88 = vsel %vm83, %v30, 0
    %v91 = vsel %vm83, %v31, 0
    %v94 = vsel %vm83, %v32, 0
    %v97 = vsel %vm83, %v47, 0
    %v100 = vsel %vm83, %v48, 0
    %v103 = vsel %vm83, %v49, 0
    %v106 = vsel %vm83, %v50, 0
    %v109 = vsel %vm83, %v51, 0
    %v112 = vsel %vm83, %v52, 0
    %v115 = vsel %vm83, %v53, 0
    %v118 = vsel %vm83, %v54, 0
    %v121 = vsel %vm83, %v55, 0
    %v124 = vsel %vm83, %v56, 0
    %v127 = vsel %vm83, %v57, 0
    %v130 = vsel %vm83, %v58, 0
    %v133 = vsel %vm83, %v59, 0
    %v136 = vsel %vm83, %v60, 0
    %v139 = vsel %vm83, %v61, 0
    %v142 = vsel %vm83, %v62, 0
    %144 = vmatprep.subr.mxu0 0.0
    %145 = vmatpush1.xpose.msra.mxu0 %v142
    %146 = vmatprep.subr.mxu0 0.0
    %147 = vmatpush1.xpose.msra.mxu0 %v139
    %148 = vmatprep.subr.mxu0 0.0
    %149 = vmatpush1.xpose.msra.mxu0 %v136
    %150 = vmatprep.subr.mxu0 0.0
    %151 = vmatpush1.xpose.msra.mxu0 %v133
    %152 = vmatprep.subr.mxu0 0.0
    %153 = vmatpush1.xpose.msra.mxu0 %v130
    %154 = vmatprep.subr.mxu0 0.0
    %155 = vmatpush1.xpose.msra.mxu0 %v127
    %156 = vmatprep.subr.mxu0 0.0
    %157 = vmatpush1.xpose.msra.mxu0 %v124
    %158 = vmatprep.subr.mxu0 0.0
    %159 = vmatpush1.xpose.msra.mxu0 %v121
    %160 = vmatprep.subr.mxu0 0.0
    %161 = vmatpush1.xpose.msra.mxu0 %v118
    %162 = vmatprep.subr.mxu0 0.0
    %163 = vmatpush1.xpose.msra.mxu0 %v115
    %164 = vmatprep.subr.mxu0 0.0
    %165 = vmatpush1.xpose.msra.mxu0 %v112
    %166 = vmatprep.subr.mxu0 0.0
    %167 = vmatpush1.xpose.msra.mxu0 %v109
    %168 = vmatprep.subr.mxu0 0.0
    %169 = vmatpush1.xpose.msra.mxu0 %v106
    %170 = vmatprep.subr.mxu0 0.0
    %171 = vmatpush1.xpose.msra.mxu0 %v103
    %172 = vmatprep.subr.mxu0 0.0
    %173 = vmatpush1.xpose.msra.mxu0 %v100
    %174 = vmatprep.subr.mxu0 0.0
    %175 = vmatpush1.xpose.msra.mxu0 %v97
    %176 = vmatprep.subr.mxu0 0.0
    %177 = vmatpush2.xpose.msra.mxu0 0.0
    %178 = vmatprep.subr.mxu0 0.0
    %179 = vmatpush2.xpose.msra.mxu0 0.0
    %180 = vmatprep.subr.mxu0 0.0
    %181 = vmatpush2.xpose.msra.mxu0 0.0
    %182 = vmatprep.subr.mxu0 0.0
    %183 = vmatpush2.xpose.msra.mxu0 0.0
    %184 = vmatprep.subr.mxu0 0.0
    %185 = vmatpush2.xpose.msra.mxu0 0.0
    %186 = vmatprep.subr.mxu0 0.0
    %187 = vmatpush2.xpose.msra.mxu0 0.0
    %188 = vmatprep.subr.mxu0 0.0
    %189 = vmatpush2.xpose.msra.mxu0 0.0
    %190 = vmatprep.subr.mxu0 0.0
    %191 = vmatpush2.xpose.msra.mxu0 0.0
    %192 = vmatprep.subr.mxu0 0.0
    %193 = vmatpush2.xpose.msra.mxu0 0.0
    %194 = vmatprep.subr.mxu0 0.0
    %195 = vmatpush2.xpose.msra.mxu0 0.0
    %196 = vmatprep.subr.mxu0 0.0
    %197 = vmatpush2.xpose.msra.mxu0 0.0
    %198 = vmatprep.subr.mxu0 0.0
    %199 = vmatpush2.xpose.msra.mxu0 0.0
    %200 = vmatprep.subr.mxu0 0.0
    %201 = vmatpush2.xpose.msra.mxu0 0.0
    %202 = vmatprep.subr.mxu0 0.0
    %203 = vmatpush2.xpose.msra.mxu0 0.0
    %204 = vmatprep.subr.mxu0 0.0
    %205 = vmatpush2.xpose.msra.mxu0 0.0
    %206 = vmatprep.subr.mxu0 0.0
    %207 = vmatpush2.xpose.msra.mxu0 0.0
    %208 = vmatprep.mubr.f32.mxu0 0.0
    %209 = vmatmul.mubr.f32.gmra.mxu0 %v85
    %v210 = vpop.f32.mrf.mxu0
    %v211 = vadd.f32 %v66, %v210
    %v212 = vpop.f32.mrf.mxu0
    %213 = vmatprep.mubr.f32.mxu0 0.0
    %214 = vmatmul.mubr.f32.gmra.mxu0 %v88
    %v215 = vpop.f32.mrf.mxu0
    %v216 = vadd.f32 %v71, %v215
    %v217 = vpop.f32.mrf.mxu0
    %218 = vmatprep.mubr.f32.mxu0 0.0
    %219 = vmatmul.mubr.f32.gmra.mxu0 %v91
    %v220 = vpop.f32.mrf.mxu0
    %v221 = vadd.f32 %v76, %v220
    %v222 = vpop.f32.mrf.mxu0
    %223 = vmatprep.mubr.f32.mxu0 0.0
    %224 = vmatmul.mubr.f32.gmra.mxu0 %v94
    %v225 = vpop.f32.mrf.mxu0
    %v226 = vadd.f32 %v81, %v225
    %v227 = vpop.f32.mrf.mxu0
    %228 = vdwg.mxu0
    %v229 = vtanh.pop %v211
    %v230 = vtanh.pop %v216
    %v231 = vtanh.pop %v221
    %v232 = vtanh.pop %v226
    %234 = vset.pattern.permute.xlu0 0
    %235 = vperm.xlu0 %234, %v41
    %v236 = vpop.permute.xlu0 %235
    %239 = vset.pattern.permute.xlu0 0
    %240 = vperm.xlu0 %239, %v42
    %v241 = vpop.permute.xlu0 %240
    %244 = vset.pattern.permute.xlu0 0
    %245 = vperm.xlu0 %244, %v43
    %v246 = vpop.permute.xlu0 %245
    %249 = vset.pattern.permute.xlu0 0
    %250 = vperm.xlu0 %249, %v44
    %v251 = vpop.permute.xlu0 %250
    %vm253 = vcmask 261120
    %v255 = vsel %vm253, %v37, 0
    %v258 = vsel %vm253, %v38, 0
    %v261 = vsel %vm253, %v39, 0
    %v264 = vsel %vm253, %v40, 0
    %266 = vmatprep.subr.mxu0 0.0
    %267 = vmatpush1.msra.mxu0 0.0
    %268 = vmatprep.subr.mxu0 0.0
    %269 = vmatpush1.msra.mxu0 0.0
    %270 = vmatprep.subr.mxu0 0.0
    %271 = vmatpush1.msra.mxu0 0.0
    %272 = vmatprep.subr.mxu0 0.0
    %273 = vmatpush1.msra.mxu0 0.0
    %274 = vmatprep.subr.mxu0 0.0
    %275 = vmatpush1.msra.mxu0 0.0
    %276 = vmatprep.subr.mxu0 0.0
    %277 = vmatpush1.msra.mxu0 0.0
    %278 = vmatprep.subr.mxu0 0.0
    %279 = vmatpush1.msra.mxu0 0.0
    %280 = vmatprep.subr.mxu0 0.0
    %281 = vmatpush1.msra.mxu0 0.0
    %282 = vmatprep.subr.mxu0 0.0
    %283 = vmatpush1.msra.mxu0 0.0
    %284 = vmatprep.subr.mxu0 0.0
    %285 = vmatpush1.msra.mxu0 0.0
    %286 = vmatprep.subr.mxu0 0.0
    %287 = vmatpush1.msra.mxu0 0.0
    %288 = vmatprep.subr.mxu0 0.0
    %289 = vmatpush1.msra.mxu0 0.0
    %290 = vmatprep.subr.mxu0 0.0
    %291 = vmatpush1.msra.mxu0 %v232
    %292 = vmatprep.subr.mxu0 0.0
    %293 = vmatpush1.msra.mxu0 %v231
    %294 = vmatprep.subr.mxu0 0.0
    %295 = vmatpush1.msra.mxu0 %v230
    %296 = vmatprep.subr.mxu0 0.0
    %297 = vmatpush1.msra.mxu0 %v229
    %298 = vmatprep.subr.mxu0 0.0
    %299 = vmatpush2.msra.mxu0 0.0
    %300 = vmatprep.subr.mxu0 0.0
    %301 = vmatpush2.msra.mxu0 0.0
    %302 = vmatprep.subr.mxu0 0.0
    %303 = vmatpush2.msra.mxu0 0.0
    %304 = vmatprep.subr.mxu0 0.0
    %305 = vmatpush2.msra.mxu0 0.0
    %306 = vmatprep.subr.mxu0 0.0
    %307 = vmatpush2.msra.mxu0 0.0
    %308 = vmatprep.subr.mxu0 0.0
    %309 = vmatpush2.msra.mxu0 0.0
    %310 = vmatprep.subr.mxu0 0.0
    %311 = vmatpush2.msra.mxu0 0.0
    %312 = vmatprep.subr.mxu0 0.0
    %313 = vmatpush2.msra.mxu0 0.0
    %314 = vmatprep.subr.mxu0 0.0
    %315 = vmatpush2.msra.mxu0 0.0
    %316 = vmatprep.subr.mxu0 0.0
    %317 = vmatpush2.msra.mxu0 0.0
    %318 = vmatprep.subr.mxu0 0.0
    %319 = vmatpush2.msra.mxu0 0.0
    %320 = vmatprep.subr.mxu0 0.0
    %321 = vmatpush2.msra.mxu0 0.0
    %322 = vmatprep.subr.mxu0 0.0
    %323 = vmatpush2.msra.mxu0 0.0
    %324 = vmatprep.subr.mxu0 0.0
    %325 = vmatpush2.msra.mxu0 0.0
    %326 = vmatprep.subr.mxu0 0.0
    %327 = vmatpush2.msra.mxu0 0.0
    %328 = vmatprep.subr.mxu0 0.0
    %329 = vmatpush2.msra.mxu0 0.0
    %330 = vmatprep.mubr.f32.mxu0 0.0
    %331 = vmatmul.mubr.f32.gmra.mxu0 %v255
    %v332 = vpop.f32.mrf.mxu0
    %v333 = vadd.f32 %v236, %v332
    %v334 = vpop.f32.mrf.mxu0
    %335 = vmatprep.mubr.f32.mxu0 0.0
    %336 = vmatmul.mubr.f32.gmra.mxu0 %v258
    %v337 = vpop.f32.mrf.mxu0
    %v338 = vadd.f32 %v241, %v337
    %v339 = vpop.f32.mrf.mxu0
    %340 = vmatprep.mubr.f32.mxu0 0.0
    %341 = vmatmul.mubr.f32.gmra.mxu0 %v261
    %v342 = vpop.f32.mrf.mxu0
    %v343 = vadd.f32 %v246, %v342
    %v344 = vpop.f32.mrf.mxu0
    %345 = vmatprep.mubr.f32.mxu0 0.0
    %346 = vmatmul.mubr.f32.gmra.mxu0 %v264
    %v347 = vpop.f32.mrf.mxu0
    %v348 = vadd.f32 %v251, %v347
    %v349 = vpop.f32.mrf.mxu0
    %350 = vdwg.mxu0
    %v351 = vtanh.pop %v333
    %v352 = vtanh.pop %v338
    %v353 = vtanh.pop %v343
    %v354 = vtanh.pop %v348
    %356 = vset.pattern.permute.xlu0 0
    %357 = vperm.xlu0 %356, %v46
    %v358 = vpop.permute.xlu0 %357
    %v360 = vlaneseq
    %v361 = vshrl.u32 %v360, 7
    %v362 = vsub.s32 0, %v361
    %v363 = vrot.slane %v358, %v362
    %v365 = vsel %vm253, %v45, 0
    %367 = vmatprep.subr.mxu0 0.0
    %368 = vmatpush1.msra.mxu0 0.0
    %369 = vmatprep.subr.mxu0 0.0
    %370 = vmatpush1.msra.mxu0 0.0
    %371 = vmatprep.subr.mxu0 0.0
    %372 = vmatpush1.msra.mxu0 0.0
    %373 = vmatprep.subr.mxu0 0.0
    %374 = vmatpush1.msra.mxu0 0.0
    %375 = vmatprep.subr.mxu0 0.0
    %376 = vmatpush1.msra.mxu0 0.0
    %377 = vmatprep.subr.mxu0 0.0
    %378 = vmatpush1.msra.mxu0 0.0
    %379 = vmatprep.subr.mxu0 0.0
    %380 = vmatpush1.msra.mxu0 0.0
    %381 = vmatprep.subr.mxu0 0.0
    %382 = vmatpush1.msra.mxu0 0.0
    %383 = vmatprep.subr.mxu0 0.0
    %384 = vmatpush1.msra.mxu0 0.0
    %385 = vmatprep.subr.mxu0 0.0
    %386 = vmatpush1.msra.mxu0 0.0
    %387 = vmatprep.subr.mxu0 0.0
    %388 = vmatpush1.msra.mxu0 0.0
    %389 = vmatprep.subr.mxu0 0.0
    %390 = vmatpush1.msra.mxu0 0.0
    %391 = vmatprep.subr.mxu0 0.0
    %392 = vmatpush1.msra.mxu0 %v354
    %393 = vmatprep.subr.mxu0 0.0
    %394 = vmatpush1.msra.mxu0 %v353
    %395 = vmatprep.subr.mxu0 0.0
    %396 = vmatpush1.msra.mxu0 %v352
    %397 = vmatprep.subr.mxu0 0.0
    %398 = vmatpush1.msra.mxu0 %v351
    %399 = vmatprep.subr.mxu0 0.0
    %400 = vmatpush2.msra.mxu0 0.0
    %401 = vmatprep.subr.mxu0 0.0
    %402 = vmatpush2.msra.mxu0 0.0
    %403 = vmatprep.subr.mxu0 0.0
    %404 = vmatpush2.msra.mxu0 0.0
    %405 = vmatprep.subr.mxu0 0.0
    %406 = vmatpush2.msra.mxu0 0.0
    %407 = vmatprep.subr.mxu0 0.0
    %408 = vmatpush2.msra.mxu0 0.0
    %409 = vmatprep.subr.mxu0 0.0
    %410 = vmatpush2.msra.mxu0 0.0
    %411 = vmatprep.subr.mxu0 0.0
    %412 = vmatpush2.msra.mxu0 0.0
    %413 = vmatprep.subr.mxu0 0.0
    %414 = vmatpush2.msra.mxu0 0.0
    %415 = vmatprep.subr.mxu0 0.0
    %416 = vmatpush2.msra.mxu0 0.0
    %417 = vmatprep.subr.mxu0 0.0
    %418 = vmatpush2.msra.mxu0 0.0
    %419 = vmatprep.subr.mxu0 0.0
    %420 = vmatpush2.msra.mxu0 0.0
    %421 = vmatprep.subr.mxu0 0.0
    %422 = vmatpush2.msra.mxu0 0.0
    %423 = vmatprep.subr.mxu0 0.0
    %424 = vmatpush2.msra.mxu0 0.0
    %425 = vmatprep.subr.mxu0 0.0
    %426 = vmatpush2.msra.mxu0 0.0
    %427 = vmatprep.subr.mxu0 0.0
    %428 = vmatpush2.msra.mxu0 0.0
    %429 = vmatprep.subr.mxu0 0.0
    %430 = vmatpush2.msra.mxu0 0.0
    %431 = vmatprep.mubr.f32.mxu0 0.0
    %432 = vmatmul.mubr.f32.gmra.mxu0 %v365
    %v433 = vpop.f32.mrf.mxu0
    %v434 = vadd.f32 %v363, %v433
    %v435 = vpop.f32.mrf.mxu0
    %436 = vdwg.mxu0
    %437 = vst [vmem:[#allocation3] sm:$0x1] %v434
    // Predicated region
    $region30: #{tpu_custom_call.1} parent=1 // pred_check
      _
    $region31: #{tpu_custom_call.1} parent=1 // pred_check_branch
      %439 = sbr.rel (0) target = $region33
    $region32: #{tpu_custom_call.1} parent=1 // pred_region
      %s441 = ssub.s32 16, 16
      %442 = vsyncadd [#allocation4], %s441
      %s444 = sshll.u32 [#allocation3], 4
      %s445 = int_to_ptr.vmem [resolvable:$true] %s444
      %447 = dma.vmem_to_hbm [thread:$0]  %s445, 16, %s7, [#allocation4]
    $region33: #{tpu_custom_call.1} parent=1 // pred_fallthru
      _
    // Predicated region
    $region34: #{tpu_custom_call.1} parent=1 // pred_check
      _
    $region35: #{tpu_custom_call.1} parent=1 // pred_check_branch
      %449 = sbr.rel (0) target = $region37
    $region36: #{tpu_custom_call.1} parent=1 // pred_region
      %450 = dma.done [#allocation4], 16
    $region37: #{tpu_custom_call.1} parent=1 // pred_fallthru
      _
    %451 = vsyncpa [#allocation4], 1

</llo_original>
